<compile_context>
chip_gen: v6e
topology: v6e:2x2x1
jax: 0.10.0
libtpu: 0.0.40
codegen_flags: <defaults>
</compile_context>

<pallas_src>
import numpy as np
import jax
import jax.numpy as jnp
from jax import lax
from jax.experimental import pallas as pl
from jax.experimental.pallas import tpu as pltpu


# --------------------------------------------------------------------------
# AlphaFold residue constants (built in-script, no file loads)
# --------------------------------------------------------------------------
ATOM_TYPES = [
    'N', 'CA', 'C', 'CB', 'O', 'CG', 'CG1', 'CG2', 'OG', 'OG1', 'SG', 'CD',
    'CD1', 'CD2', 'ND1', 'ND2', 'OD1', 'OD2', 'SD', 'CE', 'CE1', 'CE2', 'CE3',
    'NE', 'NE1', 'NE2', 'OE1', 'OE2', 'CH2', 'NH1', 'NH2', 'OH', 'CZ', 'CZ2',
    'CZ3', 'NZ', 'OXT'
]
ATOM_ORDER = {name: i for i, name in enumerate(ATOM_TYPES)}
RESTYPES = list('ARNDCQEGHILKMFPSTWYV')
RESTYPE_1TO3 = {
    'A': 'ALA', 'R': 'ARG', 'N': 'ASN', 'D': 'ASP', 'C': 'CYS', 'Q': 'GLN',
    'E': 'GLU', 'G': 'GLY', 'H': 'HIS', 'I': 'ILE', 'L': 'LEU', 'K': 'LYS',
    'M': 'MET', 'F': 'PHE', 'P': 'PRO', 'S': 'SER', 'T': 'THR', 'W': 'TRP',
    'Y': 'TYR', 'V': 'VAL'
}
CHI_ANGLES_ATOMS = {
    'ALA': [],
    'ARG': [['N', 'CA', 'CB', 'CG'], ['CA', 'CB', 'CG', 'CD'],
            ['CB', 'CG', 'CD', 'NE'], ['CG', 'CD', 'NE', 'CZ']],
    'ASN': [['N', 'CA', 'CB', 'CG'], ['CA', 'CB', 'CG', 'OD1']],
    'ASP': [['N', 'CA', 'CB', 'CG'], ['CA', 'CB', 'CG', 'OD1']],
    'CYS': [['N', 'CA', 'CB', 'SG']],
    'GLN': [['N', 'CA', 'CB', 'CG'], ['CA', 'CB', 'CG', 'CD'],
            ['CB', 'CG', 'CD', 'OE1']],
    'GLU': [['N', 'CA', 'CB', 'CG'], ['CA', 'CB', 'CG', 'CD'],
            ['CB', 'CG', 'CD', 'OE1']],
    'GLY': [],
    'HIS': [['N', 'CA', 'CB', 'CG'], ['CA', 'CB', 'CG', 'ND1']],
    'ILE': [['N', 'CA', 'CB', 'CG1'], ['CA', 'CB', 'CG1', 'CD1']],
    'LEU': [['N', 'CA', 'CB', 'CG'], ['CA', 'CB', 'CG', 'CD1']],
    'LYS': [['N', 'CA', 'CB', 'CG'], ['CA', 'CB', 'CG', 'CD'],
            ['CB', 'CG', 'CD', 'CE'], ['CG', 'CD', 'CE', 'NZ']],
    'MET': [['N', 'CA', 'CB', 'CG'], ['CA', 'CB', 'CG', 'SD'],
            ['CB', 'CG', 'SD', 'CE']],
    'PHE': [['N', 'CA', 'CB', 'CG'], ['CA', 'CB', 'CG', 'CD1']],
    'PRO': [['N', 'CA', 'CB', 'CG'], ['CA', 'CB', 'CG', 'CD']],
    'SER': [['N', 'CA', 'CB', 'OG']],
    'THR': [['N', 'CA', 'CB', 'OG1']],
    'TRP': [['N', 'CA', 'CB', 'CG'], ['CA', 'CB', 'CG', 'CD1']],
    'TYR': [['N', 'CA', 'CB', 'CG'], ['CA', 'CB', 'CG', 'CD1']],
    'VAL': [['N', 'CA', 'CB', 'CG1']],
}


def _build_chi_tables():
    chi_atom_indices, chi_angles_mask = [], []
    for r1 in RESTYPES:
        chis = CHI_ANGLES_ATOMS[RESTYPE_1TO3[r1]]
        idxs = [[ATOM_ORDER[a] for a in chi] for chi in chis]
        mask = [1.0] * len(chis)
        while len(idxs) < 4:
            idxs.append([0, 0, 0, 0])
            mask.append(0.0)
        chi_atom_indices.append(idxs)
        chi_angles_mask.append(mask)
    # UNK (20) and gap (21) residues: no chi angles.
    for _ in range(2):
        chi_atom_indices.append([[0, 0, 0, 0]] * 4)
        chi_angles_mask.append([0.0, 0.0, 0.0, 0.0])
    return (np.asarray(chi_atom_indices, np.int32),
            np.asarray(chi_angles_mask, np.float32))


CHI_ATOM_INDICES, CHI_ANGLES_MASK_TABLE = _build_chi_tables()


# --------------------------------------------------------------------------
# Glue: chi-angle geometry (gathers + dihedrals) in plain JAX
# --------------------------------------------------------------------------
# TODO(synk): the data-dependent per-residue atom gather stays in plain JAX;
# there is no clean BlockSpec expression for a per-row 4x4 atom-index gather.
def compute_chi_angles(positions, atom_mask, aatype):
    """positions (T,R,37,3) f32, atom_mask (T,R,37) f32, aatype (T,R) int32."""
    T, R = aatype.shape
    atom_idx = jnp.asarray(CHI_ATOM_INDICES)[aatype]            # (T,R,4,4)
    flat_idx = atom_idx.reshape(T, R, 16)
    pos_g = jnp.take_along_axis(positions, flat_idx[..., None], axis=2)
    pos_g = pos_g.reshape(T, R, 4, 4, 3)                        # (T,R,chi,atom,3)
    a = pos_g[..., 0, :]
    b = pos_g[..., 1, :]
    c = pos_g[..., 2, :]
    d = pos_g[..., 3, :]
    v1, v2, v3 = a - b, b - c, d - c
    c1 = jnp.cross(v1, v2)
    c2 = jnp.cross(v3, v2)
    c3 = jnp.cross(c2, c1)
    v2_mag = jnp.linalg.norm(v2, axis=-1)
    chi_angles = jnp.arctan2(jnp.sum(c3 * v2, axis=-1),
                             v2_mag * jnp.sum(c1 * c2, axis=-1))  # (T,R,4)
    chi_mask = jnp.asarray(CHI_ANGLES_MASK_TABLE)[aatype]         # (T,R,4)
    atoms_mask = jnp.take_along_axis(atom_mask, flat_idx, axis=2)
    atoms_mask = jnp.prod(atoms_mask.reshape(T, R, 4, 4), axis=-1)
    chi_mask = chi_mask * atoms_mask.astype(jnp.float32)
    return chi_angles, chi_mask


# --------------------------------------------------------------------------
# Pallas kernel.
#   Inputs per grid step:
#     aa_ref   (tm, 1)  int32   residue types (one-hot built in-kernel)
#     chi_ref  (tm, 12) f32     [sin(chi)*mask | cos(chi)*mask | mask]
#     w1aa_ref (22, C), w1chi_ref (12, C), b1_ref (1, C)   -- Linear(34, C) split
#     w2_ref   (C, C),  b2_ref (1, C)                      -- Linear(C, C)
#   Output:
#     out_ref  (tm, C)
# --------------------------------------------------------------------------
def te1d_kernel(aa_ref, chi_ref, w1aa_ref, w1chi_ref, b1_ref, w2_ref, b2_ref,
                out_ref):
    tm = aa_ref.shape[0]
    # One-hot(aatype, 22) built on-chip: iota/compare are free VPU work, and it
    # saves 88 B/row of HBM input traffic (the dominant input cost).
    res_iota = lax.broadcasted_iota(jnp.int32, (tm, 22), 1)
    onehot = (res_iota == aa_ref[...]).astype(jnp.float32)
    # Linear(34, C): split contraction over the one-hot and chi halves of W1.
    h = jnp.dot(onehot, w1aa_ref[...], preferred_element_type=jnp.float32)
    h = h + jnp.dot(chi_ref[...], w1chi_ref[...],
                    preferred_element_type=jnp.float32)
    h = h + b1_ref[...]
    h = jnp.maximum(h, 0.0)                                      # ReLU
    out = jnp.dot(h, w2_ref[...],
                  preferred_element_type=jnp.float32) + b2_ref[...]
    out_ref[...] = out.astype(out_ref.dtype)


def _round_up(x, m):
    return ((x + m - 1) // m) * m


def _choose_tiling(M, max_tm=2048):
    """Pick (tm, Mp): tm multiple of 8, even grid-step count (>=2) so both v7x
    TensorCores get work, tiles large enough to hide ~0.35us/step overhead, and
    Mp == M whenever M is already tile-able (so the output reshape is free)."""
    m8 = _round_up(max(M, 8), 8)

    def tm_for(steps):
        return _round_up(-(-m8 // steps), 8)

    if m8 <= 8:
        return 8, 8
    steps = 2
    while tm_for(steps) > max_tm:
        steps += 2
    # Prefer >=4 steps (>=2 per core: DMA/compute pipelining) if tiles stay big.
    if tm_for(4) >= 512:
        steps = max(steps, 4)
    tm = tm_for(steps)
    return tm, tm * steps


def template_embedding_1d(template_aatype, template_all_atom_positions,
                          template_all_atom_mask, params, num_channel,
                          dtype=jnp.float32):
    """Returns (activations (T,R,C), template_mask (T,R)) exactly like the
    PyTorch module's forward."""
    T, R = template_aatype.shape
    C = num_channel
    chi_angles, chi_mask = compute_chi_angles(
        template_all_atom_positions, template_all_atom_mask, template_aatype)

    M = T * R
    tm, Mp = _choose_tiling(M)

    # 12-wide chi-feature slab (sin/cos stay in the wrapper: tiny tensors, and
    # it keeps the kernel free of transcendental-lowering dependencies).
    chif = jnp.concatenate(
        [(jnp.sin(chi_angles) * chi_mask).reshape(M, 4),
         (jnp.cos(chi_angles) * chi_mask).reshape(M, 4),
         chi_mask.reshape(M, 4)], axis=-1).astype(dtype)          # (M, 12)
    aa_col = template_aatype.reshape(M, 1).astype(jnp.int32)      # (M, 1)
    if Mp != M:
        chif = jnp.pad(chif, ((0, Mp - M), (0, 0)))
        aa_col = jnp.pad(aa_col, ((0, Mp - M), (0, 0)))

    # Real (unpadded) weights; split W1 into the one-hot / chi halves.
    w1, b1, w2, b2 = params                                       # (34,C),(1,C),(C,C),(1,C)
    w1 = w1.astype(dtype)
    w1_aa, w1_chi = w1[:22, :], w1[22:, :]
    b1 = b1.astype(dtype).reshape(1, C)
    w2 = w2.astype(dtype)
    b2 = b2.astype(dtype).reshape(1, C)

    isz = jnp.dtype(dtype).itemsize
    cost = pl.CostEstimate(
        flops=2 * Mp * C * (22 + 12 + C),
        transcendentals=0,
        bytes_accessed=(Mp * (4 + 12 * isz + C * isz)
                        + (22 * C + 12 * C + C * C + 2 * C) * isz))

    out = pl.pallas_call(
        te1d_kernel,
        out_shape=jax.ShapeDtypeStruct((Mp, C), dtype),
        grid=(Mp // tm,),
        in_specs=[
            pl.BlockSpec((tm, 1), lambda i: (i, 0)),      # aatype column
            pl.BlockSpec((tm, 12), lambda i: (i, 0)),     # chi features
            pl.BlockSpec((22, C), lambda i: (0, 0)),      # W1[:22]
            pl.BlockSpec((12, C), lambda i: (0, 0)),      # W1[22:]
            pl.BlockSpec((1, C), lambda i: (0, 0)),       # b1
            pl.BlockSpec((C, C), lambda i: (0, 0)),       # W2
            pl.BlockSpec((1, C), lambda i: (0, 0)),       # b2
        ],
        out_specs=pl.BlockSpec((tm, C), lambda i: (i, 0)),
        compiler_params=pltpu.CompilerParams(
            dimension_semantics=("parallel",),
            vmem_limit_bytes=32 * 1024 * 1024),
        cost_estimate=cost,
    )(aa_col, chif, w1_aa, w1_chi, b1, w2, b2)

    if Mp != M:
        out = out[:M]
    template_activations = out.reshape(T, R, C)   # metadata-only when Mp == M
    template_mask = chi_mask[:, :, 0].astype(dtype)
    return template_activations, template_mask


# --------------------------------------------------------------------------
# Pure-JAX reference (mirrors the PyTorch forward) for correctness check
# --------------------------------------------------------------------------
def reference_forward(template_aatype, positions, atom_mask, params,
                      dtype=jnp.float32):
    chi_angles, chi_mask = compute_chi_angles(positions, atom_mask,
                                              template_aatype)
    onehot = jax.nn.one_hot(template_aatype, 22, dtype=dtype)
    feats = jnp.concatenate(
        [onehot,
         jnp.sin(chi_angles) * chi_mask,
         jnp.cos(chi_angles) * chi_mask,
         chi_mask], axis=-1).astype(dtype)
    w1, b1, w2, b2 = params
    h = jax.nn.relu(feats @ w1 + b1)
    acts = h @ w2 + b2
    return acts, chi_mask[:, :, 0].astype(dtype)


# --------------------------------------------------------------------------
if __name__ == "__main__":
    num_templates, num_res, num_channel = 2, 16, 32

    key = jax.random.PRNGKey(0)
    k_aa, k_pos, k_mask, k_w1, k_b1, k_w2, k_b2 = jax.random.split(key, 7)

    template_aatype = jax.random.randint(
        k_aa, (num_templates, num_res), 0, 22, dtype=jnp.int32)
    template_all_atom_positions = jax.random.normal(
        k_pos, (num_templates, num_res, 37, 3), dtype=jnp.float32)
    template_all_atom_mask = (
        jax.random.uniform(k_mask, (num_templates, num_res, 37)) > 0.2
    ).astype(jnp.float32)

    # Deterministic parameter init (nn.Linear(34, C) and nn.Linear(C, C)),
    # stored as (in_features, out_features): activations = x @ W + b.
    w1 = jax.random.normal(k_w1, (34, num_channel), jnp.float32) * 0.1
    b1 = jax.random.normal(k_b1, (1, num_channel), jnp.float32) * 0.1
    w2 = jax.random.normal(k_w2, (num_channel, num_channel), jnp.float32) * 0.1
    b2 = jax.random.normal(k_b2, (1, num_channel), jnp.float32) * 0.1
    params = (w1, b1, w2, b2)

    acts, tmask = template_embedding_1d(
        template_aatype, template_all_atom_positions, template_all_atom_mask,
        params, num_channel)
    acts = jax.block_until_ready(acts)
    tmask = jax.block_until_ready(tmask)

    ref_acts, ref_mask = reference_forward(
        template_aatype, template_all_atom_positions, template_all_atom_mask,
        params)

    np.testing.assert_allclose(np.asarray(acts), np.asarray(ref_acts),
                               atol=1e-4, rtol=1e-4)
    np.testing.assert_allclose(np.asarray(tmask), np.asarray(ref_mask),
                               atol=1e-6, rtol=1e-6)
    assert acts.shape == (num_templates, num_res, num_channel)
    assert tmask.shape == (num_templates, num_res)

    print("KERNEL_OK")
</pallas_src>

<mosaic_0001>
module attributes {stable_mosaic.version = 11 : i64} {
  func.func @te1d_kernel(%arg0: i32, %arg1: memref<16x1xi32, #tpu.memory_space<vmem>>, %arg2: memref<16x12xf32, #tpu.memory_space<vmem>>, %arg3: memref<22x32xf32, #tpu.memory_space<vmem>>, %arg4: memref<12x32xf32, #tpu.memory_space<vmem>>, %arg5: memref<1x32xf32, #tpu.memory_space<vmem>>, %arg6: memref<32x32xf32, #tpu.memory_space<vmem>>, %arg7: memref<1x32xf32, #tpu.memory_space<vmem>>, %arg8: memref<16x32xf32, #tpu.memory_space<vmem>>) attributes {dimension_semantics = [#tpu.dimension_semantics<parallel>], iteration_bounds = array<i64: 2>, scalar_prefetch = 0 : i64, scratch_operands = 0 : i64, tpu.core_type = #tpu.core_type<tc>, window_params = [{transform_indices = @transform_0, window_bounds = array<i64: 16, 1>}, {transform_indices = @transform_1, window_bounds = array<i64: 16, 12>}, {pipeline_mode = #tpu.pipeline_mode<synchronous>, transform_indices = @transform_2, window_bounds = array<i64: 22, 32>}, {pipeline_mode = #tpu.pipeline_mode<synchronous>, transform_indices = @transform_3, window_bounds = array<i64: 12, 32>}, {pipeline_mode = #tpu.pipeline_mode<synchronous>, transform_indices = @transform_4, window_bounds = array<i64: 1, 32>}, {pipeline_mode = #tpu.pipeline_mode<synchronous>, transform_indices = @transform_5, window_bounds = array<i64: 32, 32>}, {pipeline_mode = #tpu.pipeline_mode<synchronous>, transform_indices = @transform_6, window_bounds = array<i64: 1, 32>}, {transform_indices = @transform_7, window_bounds = array<i64: 16, 32>}]} {
    %0 = tpu.iota {dimensions = array<i32: 1>} : vector<16x22xi32>
    %c0 = arith.constant 0 : index
    %c0_0 = arith.constant 0 : index
    %1 = vector.load %arg1[%c0, %c0_0] : memref<16x1xi32, #tpu.memory_space<vmem>>, vector<16x1xi32>
    %2 = vector.broadcast %1 : vector<16x1xi32> to vector<16x22xi32>
    %3 = arith.cmpi eq, %0, %2 : vector<16x22xi32>
    %4 = arith.extui %3 : vector<16x22xi1> to vector<16x22xi32>
    %5 = arith.sitofp %4 : vector<16x22xi32> to vector<16x22xf32>
    %c0_1 = arith.constant 0 : index
    %c0_2 = arith.constant 0 : index
    %6 = vector.load %arg3[%c0_1, %c0_2] : memref<22x32xf32, #tpu.memory_space<vmem>>, vector<22x32xf32>
    %cst = arith.constant dense<0.000000e+00> : vector<16x32xf32>
    %7 = tpu.matmul %5, %6, %cst {dimension_numbers = #tpu.dot_dimension_numbers<[1], [0], [0], [1], [0, 0, 1, 1], [], []>} : vector<16x22xf32>, vector<22x32xf32>, vector<16x32xf32> -> vector<16x32xf32>
    %c0_3 = arith.constant 0 : index
    %c0_4 = arith.constant 0 : index
    %8 = vector.load %arg2[%c0_3, %c0_4] : memref<16x12xf32, #tpu.memory_space<vmem>>, vector<16x12xf32>
    %c0_5 = arith.constant 0 : index
    %c0_6 = arith.constant 0 : index
    %9 = vector.load %arg4[%c0_5, %c0_6] : memref<12x32xf32, #tpu.memory_space<vmem>>, vector<12x32xf32>
    %cst_7 = arith.constant dense<0.000000e+00> : vector<16x32xf32>
    %10 = tpu.matmul %8, %9, %cst_7 {dimension_numbers = #tpu.dot_dimension_numbers<[1], [0], [0], [1], [0, 0, 1, 1], [], []>} : vector<16x12xf32>, vector<12x32xf32>, vector<16x32xf32> -> vector<16x32xf32>
    %11 = arith.addf %7, %10 : vector<16x32xf32>
    %c0_8 = arith.constant 0 : index
    %c0_9 = arith.constant 0 : index
    %12 = vector.load %arg5[%c0_8, %c0_9] : memref<1x32xf32, #tpu.memory_space<vmem>>, vector<1x32xf32>
    %13 = vector.broadcast %12 : vector<1x32xf32> to vector<16x32xf32>
    %14 = arith.addf %11, %13 : vector<16x32xf32>
    %cst_10 = arith.constant 0.000000e+00 : f32
    %15 = vector.broadcast %cst_10 : f32 to vector<16x32xf32>
    %16 = arith.maximumf %14, %15 : vector<16x32xf32>
    %c0_11 = arith.constant 0 : index
    %c0_12 = arith.constant 0 : index
    %17 = vector.load %arg6[%c0_11, %c0_12] : memref<32x32xf32, #tpu.memory_space<vmem>>, vector<32x32xf32>
    %cst_13 = arith.constant dense<0.000000e+00> : vector<16x32xf32>
    %18 = tpu.matmul %16, %17, %cst_13 {dimension_numbers = #tpu.dot_dimension_numbers<[1], [0], [0], [1], [0, 0, 1, 1], [], []>} : vector<16x32xf32>, vector<32x32xf32>, vector<16x32xf32> -> vector<16x32xf32>
    %c0_14 = arith.constant 0 : index
    %c0_15 = arith.constant 0 : index
    %19 = vector.load %arg7[%c0_14, %c0_15] : memref<1x32xf32, #tpu.memory_space<vmem>>, vector<1x32xf32>
    %20 = vector.broadcast %19 : vector<1x32xf32> to vector<16x32xf32>
    %21 = arith.addf %18, %20 : vector<16x32xf32>
    %c0_16 = arith.constant 0 : index
    %c0_17 = arith.constant 0 : index
    %22 = vector.load %arg8[%c0_16, %c0_17] : memref<16x32xf32, #tpu.memory_space<vmem>>, vector<16x32xf32>
    tpu.vector_store %arg8[%c0_16, %c0_17], %21 {strides = array<i32>} : memref<16x32xf32, #tpu.memory_space<vmem>>, vector<16x32xf32>,
    return
  }
  func.func @transform_0(%arg0: i32) -> (i32, i32) {
    %c0_i32 = arith.constant 0 : i32
    %c0_i32_0 = arith.constant 0 : i32
    return %arg0, %c0_i32 : i32, i32
  }
  func.func @transform_1(%arg0: i32) -> (i32, i32) {
    %c0_i32 = arith.constant 0 : i32
    %c0_i32_0 = arith.constant 0 : i32
    return %arg0, %c0_i32 : i32, i32
  }
  func.func @transform_2(%arg0: i32) -> (i32, i32) {
    %c0_i32 = arith.constant 0 : i32
    %c0_i32_0 = arith.constant 0 : i32
    %c0_i32_1 = arith.constant 0 : i32
    return %c0_i32, %c0_i32_0 : i32, i32
  }
  func.func @transform_3(%arg0: i32) -> (i32, i32) {
    %c0_i32 = arith.constant 0 : i32
    %c0_i32_0 = arith.constant 0 : i32
    %c0_i32_1 = arith.constant 0 : i32
    return %c0_i32, %c0_i32_0 : i32, i32
  }
  func.func @transform_4(%arg0: i32) -> (i32, i32) {
    %c0_i32 = arith.constant 0 : i32
    %c0_i32_0 = arith.constant 0 : i32
    %c0_i32_1 = arith.constant 0 : i32
    return %c0_i32, %c0_i32_0 : i32, i32
  }
  func.func @transform_5(%arg0: i32) -> (i32, i32) {
    %c0_i32 = arith.constant 0 : i32
    %c0_i32_0 = arith.constant 0 : i32
    %c0_i32_1 = arith.constant 0 : i32
    return %c0_i32, %c0_i32_0 : i32, i32
  }
  func.func @transform_6(%arg0: i32) -> (i32, i32) {
    %c0_i32 = arith.constant 0 : i32
    %c0_i32_0 = arith.constant 0 : i32
    %c0_i32_1 = arith.constant 0 : i32
    return %c0_i32, %c0_i32_0 : i32, i32
  }
  func.func @transform_7(%arg0: i32) -> (i32, i32) {
    %c0_i32 = arith.constant 0 : i32
    %c0_i32_0 = arith.constant 0 : i32
    return %arg0, %c0_i32 : i32, i32
  }
}

</mosaic_0001>

<llo_original>
// kernel: tpu_custom_call.1
$region0: #{tpu_custom_call.1}
  #allocation0 [shape = 'u32[]', space=smem, size = 0x4, offset = 0x4, fixed_abs, tag = 'smem constant byte address 0x4 - core index']
  #allocation1 [shape = 'u32[144,128]{1,0:T(1,128)}', space=vmem, size = 0x12000, scoped, tag = 'internal scratch']
  %s0 = inlined_call_operand.vmem [shape: s32[32,1], index: 0, kind: input, shape index: {}]
  %s1 = inlined_call_operand.vmem [shape: f32[32,12], index: 1, kind: input, shape index: {}]
  %s2 = inlined_call_operand.vmem [shape: f32[22,32], index: 2, kind: input, shape index: {}]
  %s3 = inlined_call_operand.vmem [shape: f32[12,32], index: 3, kind: input, shape index: {}]
  %s4 = inlined_call_operand.vmem [shape: f32[1,32], index: 4, kind: input, shape index: {}]
  %s5 = inlined_call_operand.vmem [shape: f32[32,32], index: 5, kind: input, shape index: {}]
  %s6 = inlined_call_operand.vmem [shape: f32[1,32], index: 6, kind: input, shape index: {}]
  %s7 = inlined_call_operand.hbm [shape: f32[32,32], index: 7, kind: output, shape index: {}]
  %s8 = sld [smem:[#allocation0]]
  $region61: #{tpu_custom_call.1} parent=0
    _
  %s10 = ssub.s32 1, %s8
  %s11 = scalar_select 0, %s10, %s8
  $region1: #{tpu_custom_call.1} parent=0
    #allocation2 [shape = 'u8[16384]{0}', space=vmem, size = 0x4000, scoped, tag = 'output window, operand 0']
    #allocation3 [shape = 's32[2]{0}', space=sflag, size = 0x8, scoped, tag = 'scoped memory for tpu_custom_call.1']
    %12 = vsyncpa [#allocation3], 0
    %s13 = scalar_lea.sflag [#allocation3], 1
    %14 = vsyncpa %s13, 0
    loop: start=0, step=1, limit=4
    $region2: #{tpu_custom_call.1} parent=1 // loop_pre_header
      _
    $region3: #{tpu_custom_call.1} parent=1 // loop_header
      %s16 = sphi 0, %s20
      %p17 = scmp.ge.s32.totalorder %s16, 4
      %s26 = sphi 0, %s28
      %s29 = sphi 0, %s26
      %s30 = sphi 0, %s29
      %s46 = sphi 0, %s30
      %s52 = sphi 0, %s54
      %s55 = sphi 0, %s52
      %s56 = sphi 0, %s55
      %s72 = sphi 0, %s56
      %s76 = sphi 0, %s76
      %s78 = sphi 0, %s76
      %s79 = sphi 0, %s78
      %s93 = sphi 0, %s79
      %s97 = sphi 0, %s97
      %s99 = sphi 0, %s97
      %s100 = sphi 0, %s99
      %s114 = sphi 0, %s100
      %s118 = sphi 0, %s118
      %s120 = sphi 0, %s118
      %s121 = sphi 0, %s120
      %s135 = sphi 0, %s121
      %s139 = sphi 0, %s139
      %s141 = sphi 0, %s139
      %s142 = sphi 0, %s141
      %s156 = sphi 0, %s142
      %s160 = sphi 0, %s160
      %s162 = sphi 0, %s160
      %s163 = sphi 0, %s162
      %s177 = sphi 0, %s163
      %s183 = sphi 0, %s185
      %s186 = sphi 0, %s183
      %s187 = sphi 0, %s186
      %s203 = sphi 0, %s187
    $region4: #{tpu_custom_call.1} parent=1 // loop_header_branch
      %19 = sbr.rel (%p17) target = $region8
    $region5: #{tpu_custom_call.1} parent=1 // loop_body
      %s21 = ssub.s32 %s16, 1
      %s22 = ssub.s32 %s16, 2
      %s23 = sadd.s32 %s16, 1
      %s24 = ssub.s32 %s16, %s23
      %p25 = scmp.eq.s32.totalorder %s24, 0
      %s27 = sadd.s32 %s26, 1
      %s28 = scalar_select %p25, %s26, %s27
      %p31 = pneg %p25
      %p32 = scmp.eq.s32.totalorder %s16, 1
      %p33 = por %p31, %p32
      %p34 = scmp.ne.s32.totalorder %s26, %s29
      %p35 = scmp.eq.s32.totalorder %s16, 0
      %p36 = por %p34, %p35
      %p37 = scmp.ne.s32.totalorder %s26, %s29
      %p38 = scmp.eq.s32.totalorder %s21, 1
      %p39 = por %p37, %p38
      %p40 = scmp.ne.s32.totalorder %s29, %s30
      %p41 = scmp.eq.s32.totalorder %s21, 0
      %p42 = por %p40, %p41
      %p43 = scmp.ne.s32.totalorder %s29, %s30
      %p44 = scmp.eq.s32.totalorder %s22, 1
      %p45 = por %p43, %p44
      %p47 = scmp.ne.s32.totalorder %s30, %s46
      %p48 = scmp.eq.s32.totalorder %s22, 0
      %p49 = por %p47, %p48
      %s50 = ssub.s32 %s16, %s23
      %p51 = scmp.eq.s32.totalorder %s50, 0
      %s53 = sadd.s32 %s52, 1
      %s54 = scalar_select %p51, %s52, %s53
      %p57 = pneg %p51
      %p58 = scmp.eq.s32.totalorder %s16, 1
      %p59 = por %p57, %p58
      %p60 = scmp.ne.s32.totalorder %s52, %s55
      %p61 = scmp.eq.s32.totalorder %s16, 0
      %p62 = por %p60, %p61
      %p63 = scmp.ne.s32.totalorder %s52, %s55
      %p64 = scmp.eq.s32.totalorder %s21, 1
      %p65 = por %p63, %p64
      %p66 = scmp.ne.s32.totalorder %s55, %s56
      %p67 = scmp.eq.s32.totalorder %s21, 0
      %p68 = por %p66, %p67
      %p69 = scmp.ne.s32.totalorder %s55, %s56
      %p70 = scmp.eq.s32.totalorder %s22, 1
      %p71 = por %p69, %p70
      %p73 = scmp.ne.s32.totalorder %s56, %s72
      %p74 = scmp.eq.s32.totalorder %s22, 0
      %p75 = por %p73, %p74
      %s77 = sadd.s32 %s76, 1
      %p80 = scmp.eq.s32.totalorder %s16, 1
      %p81 = scmp.ne.s32.totalorder %s76, %s78
      %p82 = scmp.eq.s32.totalorder %s16, 0
      %p83 = por %p81, %p82
      %p84 = scmp.ne.s32.totalorder %s76, %s78
      %p85 = scmp.eq.s32.totalorder %s21, 1
      %p86 = por %p84, %p85
      %p87 = scmp.ne.s32.totalorder %s78, %s79
      %p88 = scmp.eq.s32.totalorder %s21, 0
      %p89 = por %p87, %p88
      %p90 = scmp.ne.s32.totalorder %s78, %s79
      %p91 = scmp.eq.s32.totalorder %s22, 1
      %p92 = por %p90, %p91
      %p94 = scmp.ne.s32.totalorder %s79, %s93
      %p95 = scmp.eq.s32.totalorder %s22, 0
      %p96 = por %p94, %p95
      %s98 = sadd.s32 %s97, 1
      %p101 = scmp.eq.s32.totalorder %s16, 1
      %p102 = scmp.ne.s32.totalorder %s97, %s99
      %p103 = scmp.eq.s32.totalorder %s16, 0
      %p104 = por %p102, %p103
      %p105 = scmp.ne.s32.totalorder %s97, %s99
      %p106 = scmp.eq.s32.totalorder %s21, 1
      %p107 = por %p105, %p106
      %p108 = scmp.ne.s32.totalorder %s99, %s100
      %p109 = scmp.eq.s32.totalorder %s21, 0
      %p110 = por %p108, %p109
      %p111 = scmp.ne.s32.totalorder %s99, %s100
      %p112 = scmp.eq.s32.totalorder %s22, 1
      %p113 = por %p111, %p112
      %p115 = scmp.ne.s32.totalorder %s100, %s114
      %p116 = scmp.eq.s32.totalorder %s22, 0
      %p117 = por %p115, %p116
      %s119 = sadd.s32 %s118, 1
      %p122 = scmp.eq.s32.totalorder %s16, 1
      %p123 = scmp.ne.s32.totalorder %s118, %s120
      %p124 = scmp.eq.s32.totalorder %s16, 0
      %p125 = por %p123, %p124
      %p126 = scmp.ne.s32.totalorder %s118, %s120
      %p127 = scmp.eq.s32.totalorder %s21, 1
      %p128 = por %p126, %p127
      %p129 = scmp.ne.s32.totalorder %s120, %s121
      %p130 = scmp.eq.s32.totalorder %s21, 0
      %p131 = por %p129, %p130
      %p132 = scmp.ne.s32.totalorder %s120, %s121
      %p133 = scmp.eq.s32.totalorder %s22, 1
      %p134 = por %p132, %p133
      %p136 = scmp.ne.s32.totalorder %s121, %s135
      %p137 = scmp.eq.s32.totalorder %s22, 0
      %p138 = por %p136, %p137
      %s140 = sadd.s32 %s139, 1
      %p143 = scmp.eq.s32.totalorder %s16, 1
      %p144 = scmp.ne.s32.totalorder %s139, %s141
      %p145 = scmp.eq.s32.totalorder %s16, 0
      %p146 = por %p144, %p145
      %p147 = scmp.ne.s32.totalorder %s139, %s141
      %p148 = scmp.eq.s32.totalorder %s21, 1
      %p149 = por %p147, %p148
      %p150 = scmp.ne.s32.totalorder %s141, %s142
      %p151 = scmp.eq.s32.totalorder %s21, 0
      %p152 = por %p150, %p151
      %p153 = scmp.ne.s32.totalorder %s141, %s142
      %p154 = scmp.eq.s32.totalorder %s22, 1
      %p155 = por %p153, %p154
      %p157 = scmp.ne.s32.totalorder %s142, %s156
      %p158 = scmp.eq.s32.totalorder %s22, 0
      %p159 = por %p157, %p158
      %s161 = sadd.s32 %s160, 1
      %p164 = scmp.eq.s32.totalorder %s16, 1
      %p165 = scmp.ne.s32.totalorder %s160, %s162
      %p166 = scmp.eq.s32.totalorder %s16, 0
      %p167 = por %p165, %p166
      %p168 = scmp.ne.s32.totalorder %s160, %s162
      %p169 = scmp.eq.s32.totalorder %s21, 1
      %p170 = por %p168, %p169
      %p171 = scmp.ne.s32.totalorder %s162, %s163
      %p172 = scmp.eq.s32.totalorder %s21, 0
      %p173 = por %p171, %p172
      %p174 = scmp.ne.s32.totalorder %s162, %s163
      %p175 = scmp.eq.s32.totalorder %s22, 1
      %p176 = por %p174, %p175
      %p178 = scmp.ne.s32.totalorder %s163, %s177
      %p179 = scmp.eq.s32.totalorder %s22, 0
      %p180 = por %p178, %p179
      %s181 = ssub.s32 %s16, %s23
      %p182 = scmp.eq.s32.totalorder %s181, 0
      %s184 = sadd.s32 %s183, 1
      %s185 = scalar_select %p182, %s183, %s184
      %p188 = pneg %p182
      %p189 = scmp.eq.s32.totalorder %s16, 1
      %p190 = por %p188, %p189
      %p191 = scmp.ne.s32.totalorder %s183, %s186
      %p192 = scmp.eq.s32.totalorder %s16, 0
      %p193 = por %p191, %p192
      %p194 = scmp.ne.s32.totalorder %s183, %s186
      %p195 = scmp.eq.s32.totalorder %s21, 1
      %p196 = por %p194, %p195
      %p197 = scmp.ne.s32.totalorder %s186, %s187
      %p198 = scmp.eq.s32.totalorder %s21, 0
      %p199 = por %p197, %p198
      %p200 = scmp.ne.s32.totalorder %s186, %s187
      %p201 = scmp.eq.s32.totalorder %s22, 1
      %p202 = por %p200, %p201
      %p204 = scmp.ne.s32.totalorder %s187, %s203
      %p205 = scmp.eq.s32.totalorder %s22, 0
      %p206 = por %p204, %p205
      %p207 = scmp.le.s32.totalorder 1, %s16
      %p208 = scmp.lt.s32.totalorder %s16, 3
      %p209 = pnand %p207, %p208
      %p210 = pneg %p209
      // Predicated region
      $region9: #{tpu_custom_call.1} parent=5 // pred_check
        _
      $region10: #{tpu_custom_call.1} parent=5 // pred_check_branch
        %212 = sbr.rel (%p209) target = $region12
      $region11: #{tpu_custom_call.1} parent=5 // pred_region
        %s213 = ssub.s32 %s16, 1
        // Predicated region
        $region13: #{tpu_custom_call.1} parent=11 // pred_check
          %p214 = pneg %p89
        $region14: #{tpu_custom_call.1} parent=11 // pred_check_branch
          %216 = sbr.rel (%p214) target = $region16
        $region15: #{tpu_custom_call.1} parent=11 // pred_region
          _
        $region16: #{tpu_custom_call.1} parent=11 // pred_fallthru
          _
        // Predicated region
        $region17: #{tpu_custom_call.1} parent=11 // pred_check
          %p217 = pneg %p110
        $region18: #{tpu_custom_call.1} parent=11 // pred_check_branch
          %219 = sbr.rel (%p217) target = $region20
        $region19: #{tpu_custom_call.1} parent=11 // pred_region
          _
        $region20: #{tpu_custom_call.1} parent=11 // pred_fallthru
          _
        // Predicated region
        $region21: #{tpu_custom_call.1} parent=11 // pred_check
          %p220 = pneg %p131
        $region22: #{tpu_custom_call.1} parent=11 // pred_check_branch
          %222 = sbr.rel (%p220) target = $region24
        $region23: #{tpu_custom_call.1} parent=11 // pred_region
          _
        $region24: #{tpu_custom_call.1} parent=11 // pred_fallthru
          _
        // Predicated region
        $region25: #{tpu_custom_call.1} parent=11 // pred_check
          %p223 = pneg %p152
        $region26: #{tpu_custom_call.1} parent=11 // pred_check_branch
          %225 = sbr.rel (%p223) target = $region28
        $region27: #{tpu_custom_call.1} parent=11 // pred_region
          _
        $region28: #{tpu_custom_call.1} parent=11 // pred_fallthru
          _
        // Predicated region
        $region29: #{tpu_custom_call.1} parent=11 // pred_check
          %p226 = pneg %p173
        $region30: #{tpu_custom_call.1} parent=11 // pred_check_branch
          %228 = sbr.rel (%p226) target = $region32
        $region31: #{tpu_custom_call.1} parent=11 // pred_region
          _
        $region32: #{tpu_custom_call.1} parent=11 // pred_fallthru
          _
      $region12: #{tpu_custom_call.1} parent=5 // pred_fallthru
        _
      %p229 = scmp.lt.s32.totalorder %s16, 2
      // Predicated region
      $region33: #{tpu_custom_call.1} parent=5 // pred_check
        %p230 = pneg %p229
      $region34: #{tpu_custom_call.1} parent=5 // pred_check_branch
        %232 = sbr.rel (%p230) target = $region36
      $region35: #{tpu_custom_call.1} parent=5 // pred_region
        // Predicated region
        $region37: #{tpu_custom_call.1} parent=35 // pred_check
          %p233 = pneg %p36
        $region38: #{tpu_custom_call.1} parent=35 // pred_check_branch
          %235 = sbr.rel (%p233) target = $region40
        $region39: #{tpu_custom_call.1} parent=35 // pred_region
          %s236 = smul.u32 2, %s16
          %p237 = scmp.lt.s32.totalorder %s236, 3
          %s238 = scalar_select %p237, %s236, 3
          %s239 = smul.addr %s238, 8
          %s240 = scalar_lea.vmem %s0, %s239
          %s241 = smul.u32 2, %s16
        $region40: #{tpu_custom_call.1} parent=35 // pred_fallthru
          _
        // Predicated region
        $region41: #{tpu_custom_call.1} parent=35 // pred_check
          %p242 = pneg %p62
        $region42: #{tpu_custom_call.1} parent=35 // pred_check_branch
          %244 = sbr.rel (%p242) target = $region44
        $region43: #{tpu_custom_call.1} parent=35 // pred_region
          %s245 = smul.u32 2, %s16
          %p246 = scmp.lt.s32.totalorder %s245, 3
          %s247 = scalar_select %p246, %s245, 3
          %s248 = smul.addr %s247, 8
          %s249 = scalar_lea.vmem %s1, %s248
          %s250 = smul.u32 2, %s16
        $region44: #{tpu_custom_call.1} parent=35 // pred_fallthru
          _
      $region36: #{tpu_custom_call.1} parent=5 // pred_fallthru
        _
      %p251 = scmp.le.s32.totalorder 1, %s16
      %p252 = scmp.lt.s32.totalorder %s16, 3
      %p253 = pnand %p251, %p252
      %p254 = pneg %p253
      // Predicated region
      $region45: #{tpu_custom_call.1} parent=5 // pred_check
        _
      $region46: #{tpu_custom_call.1} parent=5 // pred_check_branch
        %256 = sbr.rel (%p253) target = $region48
      $region47: #{tpu_custom_call.1} parent=5 // pred_region
        %s257 = ssub.s32 %s16, 1
        %s258 = smul.u32 2, %s21
        %p259 = scmp.lt.s32.totalorder %s258, 3
        %s260 = scalar_select %p259, %s258, 3
        %s261 = smul.addr %s260, 8
        %s262 = scalar_lea.vmem %s0, %s261
        %p263 = pneg %p42
        %p264 = pneg %p39
        %s265 = smul.u32 2, %s21
        %p266 = scmp.lt.s32.totalorder %s265, 3
        %s267 = scalar_select %p266, %s265, 3
        %s268 = smul.addr %s267, 8
        %s269 = scalar_lea.vmem %s1, %s268
        %p270 = pneg %p68
        %p271 = pneg %p65
        %p272 = pneg %p89
        %p273 = pneg %p86
        %p274 = pneg %p110
        %p275 = pneg %p107
        %p276 = pneg %p131
        %p277 = pneg %p128
        %p278 = pneg %p152
        %p279 = pneg %p149
        %p280 = pneg %p173
        %p281 = pneg %p170
        %p282 = pneg %p199
        %p283 = pneg %p196
        %s284 = sand.u32 %s186, 1
        %s285 = scalar_lea.sflag [#allocation3], %s284
        %s286 = sand.u32 %s186, 1
        %s287 = smul.addr %s286, 16
        %s288 = scalar_lea.vmem [#allocation2], %s287
        %s289 = smul.u32 2, %s21
        %p290 = scmp.lt.s32.totalorder %s289, 3
        %s291 = scalar_select %p290, %s289, 3
        %s292 = smul.addr %s291, 8
        %s293 = scalar_lea.vmem %s0, %s292
        %s294 = smul.u32 2, %s21
        %s295 = smul.u32 2, %s21
        %p296 = scmp.lt.s32.totalorder %s295, 3
        %s297 = scalar_select %p296, %s295, 3
        %s298 = smul.addr %s297, 8
        %s299 = scalar_lea.vmem %s1, %s298
        %s300 = smul.u32 2, %s21
        %s301 = smul.u32 2, %s21
        %v302 = vlaneseq
        %v303 = vand.u32 %v302, 127
        %v304 = vld [vmem:[%s293] sm:$0xff]
        %v305 = vld [vmem:[%s293 + $0x8] sm:$0xff]
        %306 = vset.pattern.permute.xlu0 0
        %307 = vperm.xlu0 %306, %v304
        %v308 = vpop.permute.xlu0 %307
        %309 = vset.pattern.permute.xlu0 0
        %310 = vperm.xlu0 %309, %v305
        %v311 = vpop.permute.xlu0 %310
        %vm312 = vcmp.eq.s32.totalorder %v303, %v308
        %vm313 = vcmp.eq.s32.totalorder %v303, %v311
        %v314 = vsel %vm312, 1, 0
        %v315 = vsel %vm313, 1, 0
        %v316 = vcvt.s32.f32 %v314
        %v317 = vcvt.s32.f32 %v315
        %v318 = vld [vmem:[%s2] sm:$0xff]
        %v319 = vld [vmem:[%s2 + $0x8] sm:$0xff]
        %v320 = vld [vmem:[%s2 + $0x10] sm:$0x3f]
        %v321 = vld [vmem:[%s299] sm:$0xff]
        %v322 = vld [vmem:[%s299 + $0x8] sm:$0xff]
        %v323 = vld [vmem:[%s3] sm:$0xff]
        %v324 = vld [vmem:[%s3 + $0x8] sm:$0xf]
        %vm325 = vcmask 97280
        %v327 = vsel %vm325, %v321, 0
        %v330 = vsel %vm325, %v322, 0
        %vm332 = vcmask 1043456
        %v334 = vsel %vm332, %v324, 0
        %336 = vmatprep.subr.mxu0 0.0
        %337 = vmatpush1.msra.mxu0 0.0
        %338 = vmatprep.subr.mxu0 0.0
        %339 = vmatpush1.msra.mxu0 0.0
        %340 = vmatprep.subr.mxu0 0.0
        %341 = vmatpush1.msra.mxu0 0.0
        %342 = vmatprep.subr.mxu0 0.0
        %343 = vmatpush1.msra.mxu0 0.0
        %344 = vmatprep.subr.mxu0 0.0
        %345 = vmatpush1.msra.mxu0 0.0
        %346 = vmatprep.subr.mxu0 0.0
        %347 = vmatpush1.msra.mxu0 0.0
        %348 = vmatprep.subr.mxu0 0.0
        %349 = vmatpush1.msra.mxu0 0.0
        %350 = vmatprep.subr.mxu0 0.0
        %351 = vmatpush1.msra.mxu0 0.0
        %352 = vmatprep.subr.mxu0 0.0
        %353 = vmatpush1.msra.mxu0 0.0
        %354 = vmatprep.subr.mxu0 0.0
        %355 = vmatpush1.msra.mxu0 0.0
        %356 = vmatprep.subr.mxu0 0.0
        %357 = vmatpush1.msra.mxu0 0.0
        %358 = vmatprep.subr.mxu0 0.0
        %359 = vmatpush1.msra.mxu0 0.0
        %360 = vmatprep.subr.mxu0 0.0
        %361 = vmatpush1.msra.mxu0 0.0
        %362 = vmatprep.subr.mxu0 0.0
        %363 = vmatpush1.msra.mxu0 0.0
        %364 = vmatprep.subr.mxu0 0.0
        %365 = vmatpush1.msra.mxu0 %v334
        %366 = vmatprep.subr.mxu0 0.0
        %367 = vmatpush1.msra.mxu0 %v323
        %368 = vmatprep.subr.mxu0 0.0
        %369 = vmatpush2.msra.mxu0 0.0
        %370 = vmatprep.subr.mxu0 0.0
        %371 = vmatpush2.msra.mxu0 0.0
        %372 = vmatprep.subr.mxu0 0.0
        %373 = vmatpush2.msra.mxu0 0.0
        %374 = vmatprep.subr.mxu0 0.0
        %375 = vmatpush2.msra.mxu0 0.0
        %376 = vmatprep.subr.mxu0 0.0
        %377 = vmatpush2.msra.mxu0 0.0
        %378 = vmatprep.subr.mxu0 0.0
        %379 = vmatpush2.msra.mxu0 0.0
        %380 = vmatprep.subr.mxu0 0.0
        %381 = vmatpush2.msra.mxu0 0.0
        %382 = vmatprep.subr.mxu0 0.0
        %383 = vmatpush2.msra.mxu0 0.0
        %384 = vmatprep.subr.mxu0 0.0
        %385 = vmatpush2.msra.mxu0 0.0
        %386 = vmatprep.subr.mxu0 0.0
        %387 = vmatpush2.msra.mxu0 0.0
        %388 = vmatprep.subr.mxu0 0.0
        %389 = vmatpush2.msra.mxu0 0.0
        %390 = vmatprep.subr.mxu0 0.0
        %391 = vmatpush2.msra.mxu0 0.0
        %392 = vmatprep.subr.mxu0 0.0
        %393 = vmatpush2.msra.mxu0 0.0
        %394 = vmatprep.subr.mxu0 0.0
        %395 = vmatpush2.msra.mxu0 0.0
        %396 = vmatprep.subr.mxu0 0.0
        %397 = vmatpush2.msra.mxu0 0.0
        %398 = vmatprep.subr.mxu0 0.0
        %399 = vmatpush2.msra.mxu0 0.0
        %400 = vmatprep.mubr.f32.mxu0 0.0
        %401 = vmatmul.mubr.f32.gmra.mxu0 %v327
        %v402 = vpop.f32.mrf.mxu0
        %v403 = vadd.f32 0.0, %v402
        %v404 = vpop.f32.mrf.mxu0
        %405 = vmatprep.mubr.f32.mxu0 0.0
        %406 = vmatmul.mubr.f32.gmra.mxu0 %v330
        %v407 = vpop.f32.mrf.mxu0
        %v408 = vadd.f32 0.0, %v407
        %v409 = vpop.f32.mrf.mxu0
        %410 = vdwg.mxu0
        %vm411 = vcmask 179200
        %v413 = vsel %vm411, %v316, 0
        %v416 = vsel %vm411, %v317, 0
        %vm418 = vcmask 1045504
        %v420 = vsel %vm418, %v320, 0
        %422 = vmatprep.subr.mxu0 0.0
        %423 = vmatpush1.msra.mxu0 0.0
        %424 = vmatprep.subr.mxu0 0.0
        %425 = vmatpush1.msra.mxu0 0.0
        %426 = vmatprep.subr.mxu0 0.0
        %427 = vmatpush1.msra.mxu0 0.0
        %428 = vmatprep.subr.mxu0 0.0
        %429 = vmatpush1.msra.mxu0 0.0
        %430 = vmatprep.subr.mxu0 0.0
        %431 = vmatpush1.msra.mxu0 0.0
        %432 = vmatprep.subr.mxu0 0.0
        %433 = vmatpush1.msra.mxu0 0.0
        %434 = vmatprep.subr.mxu0 0.0
        %435 = vmatpush1.msra.mxu0 0.0
        %436 = vmatprep.subr.mxu0 0.0
        %437 = vmatpush1.msra.mxu0 0.0
        %438 = vmatprep.subr.mxu0 0.0
        %439 = vmatpush1.msra.mxu0 0.0
        %440 = vmatprep.subr.mxu0 0.0
        %441 = vmatpush1.msra.mxu0 0.0
        %442 = vmatprep.subr.mxu0 0.0
        %443 = vmatpush1.msra.mxu0 0.0
        %444 = vmatprep.subr.mxu0 0.0
        %445 = vmatpush1.msra.mxu0 0.0
        %446 = vmatprep.subr.mxu0 0.0
        %447 = vmatpush1.msra.mxu0 0.0
        %448 = vmatprep.subr.mxu0 0.0
        %449 = vmatpush1.msra.mxu0 %v420
        %450 = vmatprep.subr.mxu0 0.0
        %451 = vmatpush1.msra.mxu0 %v319
        %452 = vmatprep.subr.mxu0 0.0
        %453 = vmatpush1.msra.mxu0 %v318
        %454 = vmatprep.subr.mxu0 0.0
        %455 = vmatpush2.msra.mxu0 0.0
        %456 = vmatprep.subr.mxu0 0.0
        %457 = vmatpush2.msra.mxu0 0.0
        %458 = vmatprep.subr.mxu0 0.0
        %459 = vmatpush2.msra.mxu0 0.0
        %460 = vmatprep.subr.mxu0 0.0
        %461 = vmatpush2.msra.mxu0 0.0
        %462 = vmatprep.subr.mxu0 0.0
        %463 = vmatpush2.msra.mxu0 0.0
        %464 = vmatprep.subr.mxu0 0.0
        %465 = vmatpush2.msra.mxu0 0.0
        %466 = vmatprep.subr.mxu0 0.0
        %467 = vmatpush2.msra.mxu0 0.0
        %468 = vmatprep.subr.mxu0 0.0
        %469 = vmatpush2.msra.mxu0 0.0
        %470 = vmatprep.subr.mxu0 0.0
        %471 = vmatpush2.msra.mxu0 0.0
        %472 = vmatprep.subr.mxu0 0.0
        %473 = vmatpush2.msra.mxu0 0.0
        %474 = vmatprep.subr.mxu0 0.0
        %475 = vmatpush2.msra.mxu0 0.0
        %476 = vmatprep.subr.mxu0 0.0
        %477 = vmatpush2.msra.mxu0 0.0
        %478 = vmatprep.subr.mxu0 0.0
        %479 = vmatpush2.msra.mxu0 0.0
        %480 = vmatprep.subr.mxu0 0.0
        %481 = vmatpush2.msra.mxu0 0.0
        %482 = vmatprep.subr.mxu0 0.0
        %483 = vmatpush2.msra.mxu0 0.0
        %484 = vmatprep.subr.mxu0 0.0
        %485 = vmatpush2.msra.mxu0 0.0
        %486 = vmatprep.mubr.f32.mxu0 0.0
        %487 = vmatmul.mubr.f32.gmra.mxu0 %v413
        %v488 = vpop.f32.mrf.mxu0
        %v489 = vadd.f32 %v403, %v488
        %v490 = vpop.f32.mrf.mxu0
        %491 = vmatprep.mubr.f32.mxu0 0.0
        %492 = vmatmul.mubr.f32.gmra.mxu0 %v416
        %v493 = vpop.f32.mrf.mxu0
        %v494 = vadd.f32 %v408, %v493
        %v495 = vpop.f32.mrf.mxu0
        %496 = vdwg.mxu0
        %v497 = vld [vmem:[%s4] sm:$0x1]
        %v499 = vlaneseq
        %v500 = vshrl.u32 %v499, 7
        %v501 = vsub.s32 0, %v500
        %v502 = vrot.slane %v497, %v501
        %v504 = vadd.f32 %v489, %v502
        %v505 = vadd.f32 %v494, %v502
        %v506 = vmax.f32 %v504, 0.0
        %v507 = vmax.f32 %v505, 0.0
        %v508 = vld [vmem:[%s5] sm:$0xff]
        %v509 = vld [vmem:[%s5 + $0x8] sm:$0xff]
        %v510 = vld [vmem:[%s5 + $0x10] sm:$0xff]
        %v511 = vld [vmem:[%s5 + $0x18] sm:$0xff]
        %v512 = vld [vmem:[%s6] sm:$0x1]
        %v514 = vlaneseq
        %v515 = vshrl.u32 %v514, 7
        %v516 = vsub.s32 0, %v515
        %v517 = vrot.slane %v512, %v516
        %vm519 = vcmask 261120
        %v521 = vsel %vm519, %v506, 0
        %v524 = vsel %vm519, %v507, 0
        %526 = vmatprep.subr.mxu0 0.0
        %527 = vmatpush1.msra.mxu0 0.0
        %528 = vmatprep.subr.mxu0 0.0
        %529 = vmatpush1.msra.mxu0 0.0
        %530 = vmatprep.subr.mxu0 0.0
        %531 = vmatpush1.msra.mxu0 0.0
        %532 = vmatprep.subr.mxu0 0.0
        %533 = vmatpush1.msra.mxu0 0.0
        %534 = vmatprep.subr.mxu0 0.0
        %535 = vmatpush1.msra.mxu0 0.0
        %536 = vmatprep.subr.mxu0 0.0
        %537 = vmatpush1.msra.mxu0 0.0
        %538 = vmatprep.subr.mxu0 0.0
        %539 = vmatpush1.msra.mxu0 0.0
        %540 = vmatprep.subr.mxu0 0.0
        %541 = vmatpush1.msra.mxu0 0.0
        %542 = vmatprep.subr.mxu0 0.0
        %543 = vmatpush1.msra.mxu0 0.0
        %544 = vmatprep.subr.mxu0 0.0
        %545 = vmatpush1.msra.mxu0 0.0
        %546 = vmatprep.subr.mxu0 0.0
        %547 = vmatpush1.msra.mxu0 0.0
        %548 = vmatprep.subr.mxu0 0.0
        %549 = vmatpush1.msra.mxu0 0.0
        %550 = vmatprep.subr.mxu0 0.0
        %551 = vmatpush1.msra.mxu0 %v511
        %552 = vmatprep.subr.mxu0 0.0
        %553 = vmatpush1.msra.mxu0 %v510
        %554 = vmatprep.subr.mxu0 0.0
        %555 = vmatpush1.msra.mxu0 %v509
        %556 = vmatprep.subr.mxu0 0.0
        %557 = vmatpush1.msra.mxu0 %v508
        %558 = vmatprep.subr.mxu0 0.0
        %559 = vmatpush2.msra.mxu0 0.0
        %560 = vmatprep.subr.mxu0 0.0
        %561 = vmatpush2.msra.mxu0 0.0
        %562 = vmatprep.subr.mxu0 0.0
        %563 = vmatpush2.msra.mxu0 0.0
        %564 = vmatprep.subr.mxu0 0.0
        %565 = vmatpush2.msra.mxu0 0.0
        %566 = vmatprep.subr.mxu0 0.0
        %567 = vmatpush2.msra.mxu0 0.0
        %568 = vmatprep.subr.mxu0 0.0
        %569 = vmatpush2.msra.mxu0 0.0
        %570 = vmatprep.subr.mxu0 0.0
        %571 = vmatpush2.msra.mxu0 0.0
        %572 = vmatprep.subr.mxu0 0.0
        %573 = vmatpush2.msra.mxu0 0.0
        %574 = vmatprep.subr.mxu0 0.0
        %575 = vmatpush2.msra.mxu0 0.0
        %576 = vmatprep.subr.mxu0 0.0
        %577 = vmatpush2.msra.mxu0 0.0
        %578 = vmatprep.subr.mxu0 0.0
        %579 = vmatpush2.msra.mxu0 0.0
        %580 = vmatprep.subr.mxu0 0.0
        %581 = vmatpush2.msra.mxu0 0.0
        %582 = vmatprep.subr.mxu0 0.0
        %583 = vmatpush2.msra.mxu0 0.0
        %584 = vmatprep.subr.mxu0 0.0
        %585 = vmatpush2.msra.mxu0 0.0
        %586 = vmatprep.subr.mxu0 0.0
        %587 = vmatpush2.msra.mxu0 0.0
        %588 = vmatprep.subr.mxu0 0.0
        %589 = vmatpush2.msra.mxu0 0.0
        %590 = vmatprep.mubr.f32.mxu0 0.0
        %591 = vmatmul.mubr.f32.gmra.mxu0 %v521
        %v592 = vpop.f32.mrf.mxu0
        %v593 = vadd.f32 %v517, %v592
        %v594 = vpop.f32.mrf.mxu0
        %595 = vmatprep.mubr.f32.mxu0 0.0
        %596 = vmatmul.mubr.f32.gmra.mxu0 %v524
        %v597 = vpop.f32.mrf.mxu0
        %v598 = vadd.f32 %v517, %v597
        %v599 = vpop.f32.mrf.mxu0
        %600 = vdwg.mxu0
        %601 = vst.msk [vmem:[%s288] sm:$0xff] %vm519, %v593
        %602 = vst.msk [vmem:[%s288 + $0x8] sm:$0xff] %vm519, %v598
        %s603 = sand.u32 %s186, 1
        %s604 = scalar_lea.sflag [#allocation3], %s603
        %s605 = sand.u32 %s186, 1
        %s606 = smul.addr %s605, 16
        %s607 = scalar_lea.vmem [#allocation2], %s606
        // Predicated region
        $region49: #{tpu_custom_call.1} parent=47 // pred_check
          %p608 = pneg %p196
        $region50: #{tpu_custom_call.1} parent=47 // pred_check_branch
          %610 = sbr.rel (%p608) target = $region52
        $region51: #{tpu_custom_call.1} parent=47 // pred_region
          %s611 = smul.u32 2, %s21
          %s613 = ssub.s32 256, 256
          %614 = vsyncadd %s604, %s613
          %s615 = smul.addr %s611, 128
          %s616 = scalar_lea.hbm %s7, %s615
          %s617 = sshll.u32 %s607, 4
          %s618 = int_to_ptr.vmem [resolvable:$true] %s617
          %623 = dma.vmem_to_hbm [thread:$0]  %s618, 256, %s616, %s604, 128, 128, 8
        $region52: #{tpu_custom_call.1} parent=47 // pred_fallthru
          _
      $region48: #{tpu_custom_call.1} parent=5 // pred_fallthru
        _
      %p624 = scmp.le.s32.totalorder 2, %s16
      // Predicated region
      $region53: #{tpu_custom_call.1} parent=5 // pred_check
        %p625 = pneg %p624
      $region54: #{tpu_custom_call.1} parent=5 // pred_check_branch
        %627 = sbr.rel (%p625) target = $region56
      $region55: #{tpu_custom_call.1} parent=5 // pred_region
        %s628 = ssub.s32 %s16, 2
        // Predicated region
        $region57: #{tpu_custom_call.1} parent=55 // pred_check
          %p629 = pneg %p202
        $region58: #{tpu_custom_call.1} parent=55 // pred_check_branch
          %631 = sbr.rel (%p629) target = $region60
        $region59: #{tpu_custom_call.1} parent=55 // pred_region
          %s632 = sand.u32 %s187, 1
          %s633 = scalar_lea.sflag [#allocation3], %s632
          %s634 = sand.u32 %s187, 1
          %s635 = smul.addr %s634, 16
          %s636 = scalar_lea.vmem [#allocation2], %s635
          %637 = dma.done %s633, 256
        $region60: #{tpu_custom_call.1} parent=55 // pred_fallthru
          _
      $region56: #{tpu_custom_call.1} parent=5 // pred_fallthru
        _
    $region6: #{tpu_custom_call.1} parent=1 // loop_footer
      %s20 = sadd.s32 1, %s16
    $region7: #{tpu_custom_call.1} parent=1 // loop_footer_branch
      %15 = sbr.rel target = $region3
    $region8: #{tpu_custom_call.1} parent=1 // loop_exit
      _
    %638 = vsyncpa [#allocation3], 1
    %s639 = scalar_lea.sflag [#allocation3], 1
    %640 = vsyncpa %s639, 1

</llo_original>
